<compile_context>
chip_gen: v6e
topology: v6e:2x2x1
jax: 0.10.0
libtpu: 0.0.40
codegen_flags: <defaults>
</compile_context>

<pallas_src>
import jax
import jax.numpy as jnp
from jax.experimental import pallas as pl
from jax.experimental.pallas import tpu as pltpu

BN_EPS = 1e-5


def gated_stgcn_kernel(x_ref, wc_ref, wg_ref, bc_ref, bg_ref, a_ref,
                       wgcn_ref, bgcn_ref, m_ref, gamma_ref, beta_ref,
                       out_ref):
    # ---- gated dilated temporal conv: all taps & time steps in 2 wide matmuls
    x = x_ref[...]                                             # (BN, T*3Cin) bf16
    conv = jnp.dot(x, wc_ref[...],
                   preferred_element_type=jnp.float32) + bc_ref[...]
    gate = jnp.dot(x, wg_ref[...],
                   preferred_element_type=jnp.float32) + bg_ref[...]
    y = (conv * jax.nn.sigmoid(gate)).astype(wgcn_ref.dtype)   # (BN, T*Cout) bf16

    # ---- GCN: block-diagonal linear over T + A_hat aggregation (2 matmuls) ----
    hw = jnp.dot(y, wgcn_ref[...], preferred_element_type=jnp.float32)
    z = jnp.dot(a_ref[...], hw.astype(a_ref.dtype),
                preferred_element_type=jnp.float32) + bgcn_ref[...]   # f32

    # ---- BatchNorm2d (training-mode batch stats, one pass) + affine + ReLU ----
    # m_ref = kron(ones(T,T), eye(C)) / T: reduces over the T column groups and
    # broadcasts the per-channel result back to full (1, T*C) lane width, so no
    # in-kernel reshape/tile/slice is needed.
    zbar = jnp.dot(z, m_ref[...], preferred_element_type=jnp.float32)
    z2bar = jnp.dot(z * z, m_ref[...], preferred_element_type=jnp.float32)
    mean = jnp.mean(zbar, axis=0, keepdims=True)               # (1, T*Cout)
    ex2 = jnp.mean(z2bar, axis=0, keepdims=True)
    var = ex2 - mean * mean                                    # biased variance
    scale = gamma_ref[...] * jax.lax.rsqrt(var + BN_EPS)
    shift = beta_ref[...] - mean * scale
    out_ref[...] = jnp.maximum(z * scale + shift, 0.0)


def build_gcn_adjacency(edge_index, edge_weights, num_nodes_total):
    """Dense normalized adjacency D^-1/2 (A + I) D^-1/2 over B*N rows,
    matching PyG GCNConv semantics when called with x of shape (B*N, C)."""
    src = edge_index[0].astype(jnp.int32)
    dst = edge_index[1].astype(jnp.int32)
    e = src.shape[0]
    w = (jnp.ones((e,), jnp.float32) if edge_weights is None
         else edge_weights.astype(jnp.float32))
    loop = jnp.arange(num_nodes_total, dtype=jnp.int32)
    src_all = jnp.concatenate([src, loop])
    dst_all = jnp.concatenate([dst, loop])
    w_all = jnp.concatenate([w, jnp.ones((num_nodes_total,), jnp.float32)])
    deg = jnp.zeros((num_nodes_total,), jnp.float32).at[dst_all].add(w_all)
    dinv = jnp.where(deg > 0, jax.lax.rsqrt(jnp.maximum(deg, 1e-12)), 0.0)
    norm = dinv[src_all] * w_all * dinv[dst_all]
    a = jnp.zeros((num_nodes_total, num_nodes_total), jnp.float32)
    return a.at[dst_all, src_all].add(norm)


def prepare_operands(params, x, edge_index, edge_weights, dilation):
    """Wrapper-side layout plumbing: taps, block-diagonal weights, tiled biases."""
    b, t, n, cin = x.shape
    cout = params["wc"].shape[2]
    bn = b * n

    # pre-shifted, zero-padded taps; rows node-major, cols = t*(3Cin) + k*Cin + ci
    xn = jnp.transpose(x, (0, 2, 1, 3))                          # (B, N, T, Cin)
    xp = jnp.pad(xn, ((0, 0), (0, 0), (dilation, dilation), (0, 0)))
    taps = jnp.concatenate(
        [xp[:, :, k * dilation:k * dilation + t, :] for k in range(3)], axis=-1)
    xcat = taps.reshape(bn, t * 3 * cin).astype(jnp.bfloat16)    # (BN, T*3Cin)

    eye_t = jnp.eye(t, dtype=jnp.float32)
    wconv = jnp.kron(eye_t, params["wc"].reshape(3 * cin, cout)).astype(jnp.bfloat16)
    wgate = jnp.kron(eye_t, params["wg"].reshape(3 * cin, cout)).astype(jnp.bfloat16)
    wgcn = jnp.kron(eye_t, params["wgcn_t"]).astype(jnp.bfloat16)
    bc_full = jnp.tile(params["bc"], (1, t))                     # (1, T*Cout)
    bg_full = jnp.tile(params["bg"], (1, t))
    bgcn_full = jnp.tile(params["bgcn"], (1, t))
    gamma_full = jnp.tile(params["gamma"], (1, t))
    beta_full = jnp.tile(params["beta"], (1, t))

    a_hat = build_gcn_adjacency(edge_index, edge_weights, bn).astype(jnp.bfloat16)

    # per-channel reduce-over-T + broadcast-back matrix for BatchNorm stats
    m_mat = jnp.kron(jnp.ones((t, t), jnp.float32),
                     jnp.eye(cout, dtype=jnp.float32)) / t        # (T*Cout, T*Cout)

    return (xcat, wconv, wgate, bc_full, bg_full, a_hat, wgcn, bgcn_full,
            m_mat, gamma_full, beta_full)


def gated_stgcn_forward(params, x, edge_index, edge_weights=None, dilation=2):
    b, t, n, _ = x.shape
    cout = params["wc"].shape[2]
    bn = b * n
    ops = prepare_operands(params, x, edge_index, edge_weights, dilation)

    out2d = pl.pallas_call(
        gated_stgcn_kernel,
        out_shape=jax.ShapeDtypeStruct((bn, t * cout), jnp.float32),
        in_specs=[pl.BlockSpec(memory_space=pltpu.MemorySpace.VMEM)] * len(ops),
        out_specs=pl.BlockSpec(memory_space=pltpu.MemorySpace.VMEM),
    )(*ops)

    # (BN, T*Cout) -> (B, T, N, Cout)
    return jnp.transpose(out2d.reshape(b, n, t, cout), (0, 2, 1, 3))


def reference_forward(params, x, edge_index, edge_weights=None, dilation=2):
    """Plain-JAX reference with identical math & precision (bf16 matmul inputs,
    f32 accumulation) for sanity checking the kernel."""
    b, t, n, cin = x.shape
    cout = params["wc"].shape[2]
    bn = b * n
    a_hat = build_gcn_adjacency(edge_index, edge_weights, bn).astype(jnp.bfloat16)

    xp = jnp.pad(x, ((0, 0), (dilation, dilation), (0, 0), (0, 0)))
    conv = jnp.zeros((b, t, n, cout), jnp.float32) + params["bc"][0]
    gate = jnp.zeros((b, t, n, cout), jnp.float32) + params["bg"][0]
    for k in range(3):
        tap = xp[:, k * dilation:k * dilation + t].astype(jnp.bfloat16)
        conv = conv + jnp.einsum("btnc,cd->btnd", tap,
                                 params["wc"][k].astype(jnp.bfloat16),
                                 preferred_element_type=jnp.float32)
        gate = gate + jnp.einsum("btnc,cd->btnd", tap,
                                 params["wg"][k].astype(jnp.bfloat16),
                                 preferred_element_type=jnp.float32)
    y = conv * jax.nn.sigmoid(gate)                               # (B, T, N, Cout)

    wgcn_bf = params["wgcn_t"].astype(jnp.bfloat16)
    zs = []
    for ti in range(t):
        h = y[:, ti].reshape(bn, cout).astype(jnp.bfloat16)
        hw = jnp.dot(h, wgcn_bf, preferred_element_type=jnp.float32)
        zt = jnp.dot(a_hat, hw.astype(jnp.bfloat16),
                     preferred_element_type=jnp.float32) + params["bgcn"]
        zs.append(zt.reshape(b, n, cout))
    z = jnp.stack(zs, axis=1)                                     # (B, T, N, Cout)

    mean = jnp.mean(z, axis=(0, 1, 2), keepdims=True)
    var = jnp.mean((z - mean) ** 2, axis=(0, 1, 2), keepdims=True)
    zn = (z - mean) * jax.lax.rsqrt(var + BN_EPS)
    return jnp.maximum(zn * params["gamma"][0] + params["beta"][0], 0.0)


def init_params(key, cin, cout):
    ks = jax.random.split(key, 6)
    return {
        # temporal conv: wc[k, ci, co] == torch conv.weight[co, ci, 0, k]
        "wc": 0.3 * jax.random.normal(ks[0], (3, cin, cout), jnp.float32),
        "bc": 0.1 * jax.random.normal(ks[1], (1, cout), jnp.float32),
        "wg": 0.3 * jax.random.normal(ks[2], (3, cin, cout), jnp.float32),
        "bg": 0.1 * jax.random.normal(ks[3], (1, cout), jnp.float32),
        # GCN linear applied as x @ W^T : pass W^T directly
        "wgcn_t": 0.3 * jax.random.normal(ks[4], (cout, cout), jnp.float32),
        "bgcn": 0.1 * jax.random.normal(ks[5], (1, cout), jnp.float32),
        "gamma": jnp.ones((1, cout), jnp.float32),
        "beta": jnp.zeros((1, cout), jnp.float32),
    }
    # TODO(synk): BatchNorm2d running-stat updates (a training-mode side effect)
    # are not reproduced; only the forward batch-stat normalization is.


if __name__ == "__main__":
    B, T, N, C_IN, C_OUT, DIL = 2, 8, 16, 4, 8, 2

    key = jax.random.PRNGKey(0)
    k_x, k_p, k_w = jax.random.split(key, 3)
    x = jax.random.normal(k_x, (B, T, N, C_IN), jnp.float32)
    params = init_params(k_p, C_IN, C_OUT)

    # bidirectional ring graph on the N nodes (edge_index indexes 0..N-1,
    # exactly like the PyTorch module would receive)
    idx = jnp.arange(N, dtype=jnp.int32)
    src = jnp.concatenate([idx, (idx + 1) % N])
    dst = jnp.concatenate([(idx + 1) % N, idx])
    edge_index = jnp.stack([src, dst], axis=0)                    # (2, 2N)
    edge_weights = 0.5 + jax.random.uniform(k_w, (2 * N,), jnp.float32)

    out = gated_stgcn_forward(params, x, edge_index, edge_weights, DIL)
    out = jax.block_until_ready(out)

    ref = reference_forward(params, x, edge_index, edge_weights, DIL)
    assert out.shape == (B, T, N, C_OUT)
    assert jnp.allclose(out, ref, atol=1e-3, rtol=1e-3), "mismatch vs reference"

    print("KERNEL_OK")
</pallas_src>

<mosaic_0001>
module attributes {stable_mosaic.version = 11 : i64} {
  func.func @gated_stgcn_kernel(%arg0: memref<32x96xbf16, #tpu.memory_space<vmem>>, %arg1: memref<96x64xbf16, #tpu.memory_space<vmem>>, %arg2: memref<96x64xbf16, #tpu.memory_space<vmem>>, %arg3: memref<1x64xf32, #tpu.memory_space<vmem>>, %arg4: memref<1x64xf32, #tpu.memory_space<vmem>>, %arg5: memref<32x32xbf16, #tpu.memory_space<vmem>>, %arg6: memref<64x64xbf16, #tpu.memory_space<vmem>>, %arg7: memref<1x64xf32, #tpu.memory_space<vmem>>, %arg8: memref<64x64xf32, #tpu.memory_space<vmem>>, %arg9: memref<1x64xf32, #tpu.memory_space<vmem>>, %arg10: memref<1x64xf32, #tpu.memory_space<vmem>>, %arg11: memref<32x64xf32, #tpu.memory_space<vmem>>) attributes {dimension_semantics = [], scalar_prefetch = 0 : i64, scratch_operands = 0 : i64, tpu.core_type = #tpu.core_type<tc>} {
    %c0 = arith.constant 0 : index
    %c0_0 = arith.constant 0 : index
    %0 = vector.load %arg0[%c0, %c0_0] : memref<32x96xbf16, #tpu.memory_space<vmem>>, vector<32x96xbf16>
    %c0_1 = arith.constant 0 : index
    %c0_2 = arith.constant 0 : index
    %1 = vector.load %arg1[%c0_1, %c0_2] : memref<96x64xbf16, #tpu.memory_space<vmem>>, vector<96x64xbf16>
    %cst = arith.constant dense<0.000000e+00> : vector<32x64xf32>
    %2 = tpu.matmul %0, %1, %cst {dimension_numbers = #tpu.dot_dimension_numbers<[1], [0], [0], [1], [0, 0, 1, 1], [], []>} : vector<32x96xbf16>, vector<96x64xbf16>, vector<32x64xf32> -> vector<32x64xf32>
    %c0_3 = arith.constant 0 : index
    %c0_4 = arith.constant 0 : index
    %3 = vector.load %arg3[%c0_3, %c0_4] : memref<1x64xf32, #tpu.memory_space<vmem>>, vector<1x64xf32>
    %4 = vector.broadcast %3 : vector<1x64xf32> to vector<32x64xf32>
    %5 = arith.addf %2, %4 : vector<32x64xf32>
    %c0_5 = arith.constant 0 : index
    %c0_6 = arith.constant 0 : index
    %6 = vector.load %arg2[%c0_5, %c0_6] : memref<96x64xbf16, #tpu.memory_space<vmem>>, vector<96x64xbf16>
    %cst_7 = arith.constant dense<0.000000e+00> : vector<32x64xf32>
    %7 = tpu.matmul %0, %6, %cst_7 {dimension_numbers = #tpu.dot_dimension_numbers<[1], [0], [0], [1], [0, 0, 1, 1], [], []>} : vector<32x96xbf16>, vector<96x64xbf16>, vector<32x64xf32> -> vector<32x64xf32>
    %c0_8 = arith.constant 0 : index
    %c0_9 = arith.constant 0 : index
    %8 = vector.load %arg4[%c0_8, %c0_9] : memref<1x64xf32, #tpu.memory_space<vmem>>, vector<1x64xf32>
    %9 = vector.broadcast %8 : vector<1x64xf32> to vector<32x64xf32>
    %10 = arith.addf %7, %9 : vector<32x64xf32>
    %11 = arith.negf %10 : vector<32x64xf32>
    %12 = math.exp %11 : vector<32x64xf32>
    %cst_10 = arith.constant 1.000000e+00 : f32
    %13 = vector.broadcast %cst_10 : f32 to vector<32x64xf32>
    %14 = arith.addf %13, %12 : vector<32x64xf32>
    %15 = arith.divf %13, %14 : vector<32x64xf32>
    %16 = arith.mulf %5, %15 : vector<32x64xf32>
    %17 = arith.truncf %16 : vector<32x64xf32> to vector<32x64xbf16>
    %c0_11 = arith.constant 0 : index
    %c0_12 = arith.constant 0 : index
    %18 = vector.load %arg6[%c0_11, %c0_12] : memref<64x64xbf16, #tpu.memory_space<vmem>>, vector<64x64xbf16>
    %cst_13 = arith.constant dense<0.000000e+00> : vector<32x64xf32>
    %19 = tpu.matmul %17, %18, %cst_13 {dimension_numbers = #tpu.dot_dimension_numbers<[1], [0], [0], [1], [0, 0, 1, 1], [], []>} : vector<32x64xbf16>, vector<64x64xbf16>, vector<32x64xf32> -> vector<32x64xf32>
    %c0_14 = arith.constant 0 : index
    %c0_15 = arith.constant 0 : index
    %20 = vector.load %arg5[%c0_14, %c0_15] : memref<32x32xbf16, #tpu.memory_space<vmem>>, vector<32x32xbf16>
    %21 = arith.truncf %19 : vector<32x64xf32> to vector<32x64xbf16>
    %cst_16 = arith.constant dense<0.000000e+00> : vector<32x64xf32>
    %22 = tpu.matmul %20, %21, %cst_16 {dimension_numbers = #tpu.dot_dimension_numbers<[1], [0], [0], [1], [0, 0, 1, 1], [], []>} : vector<32x32xbf16>, vector<32x64xbf16>, vector<32x64xf32> -> vector<32x64xf32>
    %c0_17 = arith.constant 0 : index
    %c0_18 = arith.constant 0 : index
    %23 = vector.load %arg7[%c0_17, %c0_18] : memref<1x64xf32, #tpu.memory_space<vmem>>, vector<1x64xf32>
    %24 = vector.broadcast %23 : vector<1x64xf32> to vector<32x64xf32>
    %25 = arith.addf %22, %24 : vector<32x64xf32>
    %c0_19 = arith.constant 0 : index
    %c0_20 = arith.constant 0 : index
    %26 = vector.load %arg8[%c0_19, %c0_20] : memref<64x64xf32, #tpu.memory_space<vmem>>, vector<64x64xf32>
    %cst_21 = arith.constant dense<0.000000e+00> : vector<32x64xf32>
    %27 = tpu.matmul %25, %26, %cst_21 {dimension_numbers = #tpu.dot_dimension_numbers<[1], [0], [0], [1], [0, 0, 1, 1], [], []>} : vector<32x64xf32>, vector<64x64xf32>, vector<32x64xf32> -> vector<32x64xf32>
    %28 = arith.mulf %25, %25 : vector<32x64xf32>
    %c0_22 = arith.constant 0 : index
    %c0_23 = arith.constant 0 : index
    %29 = vector.load %arg8[%c0_22, %c0_23] : memref<64x64xf32, #tpu.memory_space<vmem>>, vector<64x64xf32>
    %cst_24 = arith.constant dense<0.000000e+00> : vector<32x64xf32>
    %30 = tpu.matmul %28, %29, %cst_24 {dimension_numbers = #tpu.dot_dimension_numbers<[1], [0], [0], [1], [0, 0, 1, 1], [], []>} : vector<32x64xf32>, vector<64x64xf32>, vector<32x64xf32> -> vector<32x64xf32>
    %cst_25 = arith.constant dense<0.000000e+00> : vector<64xf32>
    %31 = vector.multi_reduction <add>, %27, %cst_25 [0] : vector<32x64xf32> to vector<64xf32>
    %32 = vector.shape_cast %31 : vector<64xf32> to vector<1x64xf32>
    %cst_26 = arith.constant 3.200000e+01 : f32
    %33 = vector.broadcast %cst_26 : f32 to vector<1x64xf32>
    %34 = arith.divf %32, %33 : vector<1x64xf32>
    %cst_27 = arith.constant dense<0.000000e+00> : vector<64xf32>
    %35 = vector.multi_reduction <add>, %30, %cst_27 [0] : vector<32x64xf32> to vector<64xf32>
    %36 = vector.shape_cast %35 : vector<64xf32> to vector<1x64xf32>
    %cst_28 = arith.constant 3.200000e+01 : f32
    %37 = vector.broadcast %cst_28 : f32 to vector<1x64xf32>
    %38 = arith.divf %36, %37 : vector<1x64xf32>
    %39 = arith.mulf %34, %34 : vector<1x64xf32>
    %40 = arith.subf %38, %39 : vector<1x64xf32>
    %c0_29 = arith.constant 0 : index
    %c0_30 = arith.constant 0 : index
    %41 = vector.load %arg9[%c0_29, %c0_30] : memref<1x64xf32, #tpu.memory_space<vmem>>, vector<1x64xf32>
    %cst_31 = arith.constant 9.99999974E-6 : f32
    %42 = vector.broadcast %cst_31 : f32 to vector<1x64xf32>
    %43 = arith.addf %40, %42 : vector<1x64xf32>
    %44 = math.rsqrt %43 : vector<1x64xf32>
    %45 = arith.mulf %41, %44 : vector<1x64xf32>
    %c0_32 = arith.constant 0 : index
    %c0_33 = arith.constant 0 : index
    %46 = vector.load %arg10[%c0_32, %c0_33] : memref<1x64xf32, #tpu.memory_space<vmem>>, vector<1x64xf32>
    %47 = arith.mulf %34, %45 : vector<1x64xf32>
    %48 = arith.subf %46, %47 : vector<1x64xf32>
    %49 = vector.broadcast %45 : vector<1x64xf32> to vector<32x64xf32>
    %50 = arith.mulf %25, %49 : vector<32x64xf32>
    %51 = vector.broadcast %48 : vector<1x64xf32> to vector<32x64xf32>
    %52 = arith.addf %50, %51 : vector<32x64xf32>
    %cst_34 = arith.constant 0.000000e+00 : f32
    %53 = vector.broadcast %cst_34 : f32 to vector<32x64xf32>
    %54 = arith.maximumf %52, %53 : vector<32x64xf32>
    %c0_35 = arith.constant 0 : index
    %c0_36 = arith.constant 0 : index
    %55 = vector.load %arg11[%c0_35, %c0_36] : memref<32x64xf32, #tpu.memory_space<vmem>>, vector<32x64xf32>
    tpu.vector_store %arg11[%c0_35, %c0_36], %54 {strides = array<i32>} : memref<32x64xf32, #tpu.memory_space<vmem>>, vector<32x64xf32>,
    return
  }
}

</mosaic_0001>

<llo_original>
// kernel: tpu_custom_call.1
$region0: #{tpu_custom_call.1}
  #allocation0 [shape = 'u32[]', space=smem, size = 0x4, offset = 0x4, fixed_abs, tag = 'smem constant byte address 0x4 - core index']
  #allocation1 [shape = 'u32[144,128]{1,0:T(1,128)}', space=vmem, size = 0x12000, scoped, tag = 'internal scratch']
  %s0 = inlined_call_operand.vmem [shape: bf16[32,96], index: 0, kind: input, shape index: {}]
  %s1 = inlined_call_operand.vmem [shape: bf16[96,64], index: 1, kind: input, shape index: {}]
  %s2 = inlined_call_operand.vmem [shape: bf16[96,64], index: 2, kind: input, shape index: {}]
  %s3 = inlined_call_operand.vmem [shape: f32[1,64], index: 3, kind: input, shape index: {}]
  %s4 = inlined_call_operand.vmem [shape: f32[1,64], index: 4, kind: input, shape index: {}]
  %s5 = inlined_call_operand.vmem [shape: bf16[32,32], index: 5, kind: input, shape index: {}]
  %s6 = inlined_call_operand.vmem [shape: bf16[64,64], index: 6, kind: input, shape index: {}]
  %s7 = inlined_call_operand.vmem [shape: f32[1,64], index: 7, kind: input, shape index: {}]
  %s8 = inlined_call_operand.vmem [shape: f32[64,64], index: 8, kind: input, shape index: {}]
  %s9 = inlined_call_operand.vmem [shape: f32[1,64], index: 9, kind: input, shape index: {}]
  %s10 = inlined_call_operand.vmem [shape: f32[1,64], index: 10, kind: input, shape index: {}]
  %s11 = inlined_call_operand.hbm [shape: f32[32,64], index: 11, kind: output, shape index: {}]
  %s12 = sld [smem:[#allocation0]]
  $region54: #{tpu_custom_call.1} parent=0
    _
  %s14 = ssub.s32 1, %s12
  %s15 = scalar_select 0, %s14, %s12
  $region1: #{tpu_custom_call.1} parent=0
    #allocation2 [shape = 'u8[16384]{0}', space=vmem, size = 0x4000, scoped, tag = 'output window, operand 0, single buffered']
    #allocation3 [shape = 's32[1]{0}', space=sflag, size = 0x4, scoped, tag = 'scoped memory for tpu_custom_call.1']
    %16 = vsyncpa [#allocation3], 0
    // Predicated region
    $region2: #{tpu_custom_call.1} parent=1 // pred_check
      _
    $region3: #{tpu_custom_call.1} parent=1 // pred_check_branch
      %18 = sbr.rel (0) target = $region5
    $region4: #{tpu_custom_call.1} parent=1 // pred_region
      _
    $region5: #{tpu_custom_call.1} parent=1 // pred_fallthru
      _
    // Predicated region
    $region6: #{tpu_custom_call.1} parent=1 // pred_check
      _
    $region7: #{tpu_custom_call.1} parent=1 // pred_check_branch
      %20 = sbr.rel (0) target = $region9
    $region8: #{tpu_custom_call.1} parent=1 // pred_region
      _
    $region9: #{tpu_custom_call.1} parent=1 // pred_fallthru
      _
    // Predicated region
    $region10: #{tpu_custom_call.1} parent=1 // pred_check
      _
    $region11: #{tpu_custom_call.1} parent=1 // pred_check_branch
      %22 = sbr.rel (0) target = $region13
    $region12: #{tpu_custom_call.1} parent=1 // pred_region
      _
    $region13: #{tpu_custom_call.1} parent=1 // pred_fallthru
      _
    // Predicated region
    $region14: #{tpu_custom_call.1} parent=1 // pred_check
      _
    $region15: #{tpu_custom_call.1} parent=1 // pred_check_branch
      %24 = sbr.rel (0) target = $region17
    $region16: #{tpu_custom_call.1} parent=1 // pred_region
      _
    $region17: #{tpu_custom_call.1} parent=1 // pred_fallthru
      _
    // Predicated region
    $region18: #{tpu_custom_call.1} parent=1 // pred_check
      _
    $region19: #{tpu_custom_call.1} parent=1 // pred_check_branch
      %26 = sbr.rel (0) target = $region21
    $region20: #{tpu_custom_call.1} parent=1 // pred_region
      _
    $region21: #{tpu_custom_call.1} parent=1 // pred_fallthru
      _
    // Predicated region
    $region22: #{tpu_custom_call.1} parent=1 // pred_check
      _
    $region23: #{tpu_custom_call.1} parent=1 // pred_check_branch
      %28 = sbr.rel (0) target = $region25
    $region24: #{tpu_custom_call.1} parent=1 // pred_region
      _
    $region25: #{tpu_custom_call.1} parent=1 // pred_fallthru
      _
    // Predicated region
    $region26: #{tpu_custom_call.1} parent=1 // pred_check
      _
    $region27: #{tpu_custom_call.1} parent=1 // pred_check_branch
      %30 = sbr.rel (0) target = $region29
    $region28: #{tpu_custom_call.1} parent=1 // pred_region
      _
    $region29: #{tpu_custom_call.1} parent=1 // pred_fallthru
      _
    // Predicated region
    $region30: #{tpu_custom_call.1} parent=1 // pred_check
      _
    $region31: #{tpu_custom_call.1} parent=1 // pred_check_branch
      %32 = sbr.rel (0) target = $region33
    $region32: #{tpu_custom_call.1} parent=1 // pred_region
      _
    $region33: #{tpu_custom_call.1} parent=1 // pred_fallthru
      _
    // Predicated region
    $region34: #{tpu_custom_call.1} parent=1 // pred_check
      _
    $region35: #{tpu_custom_call.1} parent=1 // pred_check_branch
      %34 = sbr.rel (0) target = $region37
    $region36: #{tpu_custom_call.1} parent=1 // pred_region
      _
    $region37: #{tpu_custom_call.1} parent=1 // pred_fallthru
      _
    // Predicated region
    $region38: #{tpu_custom_call.1} parent=1 // pred_check
      _
    $region39: #{tpu_custom_call.1} parent=1 // pred_check_branch
      %36 = sbr.rel (0) target = $region41
    $region40: #{tpu_custom_call.1} parent=1 // pred_region
      _
    $region41: #{tpu_custom_call.1} parent=1 // pred_fallthru
      _
    // Predicated region
    $region42: #{tpu_custom_call.1} parent=1 // pred_check
      _
    $region43: #{tpu_custom_call.1} parent=1 // pred_check_branch
      %38 = sbr.rel (0) target = $region45
    $region44: #{tpu_custom_call.1} parent=1 // pred_region
      _
    $region45: #{tpu_custom_call.1} parent=1 // pred_fallthru
      _
    %v40 = vld [vmem:[%s0] sm:$0xf]
    %v41 = vld [vmem:[%s0 + $0x4] sm:$0xf]
    %v42 = vld [vmem:[%s0 + $0x8] sm:$0xf]
    %v43 = vld [vmem:[%s0 + $0xc] sm:$0xf]
    %v44 = vld [vmem:[%s1] sm:$0xf]
    %v45 = vld [vmem:[%s1 + $0x4] sm:$0xf]
    %v46 = vld [vmem:[%s1 + $0x8] sm:$0xf]
    %v47 = vld [vmem:[%s1 + $0xc] sm:$0xf]
    %v48 = vld [vmem:[%s1 + $0x10] sm:$0xf]
    %v49 = vld [vmem:[%s1 + $0x14] sm:$0xf]
    %v50 = vld [vmem:[%s1 + $0x18] sm:$0xf]
    %v51 = vld [vmem:[%s1 + $0x1c] sm:$0xf]
    %v52 = vld [vmem:[%s1 + $0x20] sm:$0xf]
    %v53 = vld [vmem:[%s1 + $0x24] sm:$0xf]
    %v54 = vld [vmem:[%s1 + $0x28] sm:$0xf]
    %v55 = vld [vmem:[%s1 + $0x2c] sm:$0xf]
    %v56 = vld [vmem:[%s3] sm:$0x1]
    %v58 = vlaneseq
    %v59 = vshrl.u32 %v58, 7
    %v60 = vsub.s32 0, %v59
    %v61 = vrot.slane %v56, %v60
    %v67 = vunpack.c.l.b16 %v40
    %v68 = vunpack.c.l.b16 %v41
    %v69 = vunpack.c.l.b16 %v42
    %v70 = vunpack.c.l.b16 %v43
    %v71 = vpack.c.b16 %v68, %v67
    %v72 = vpack.c.b16 %v70, %v69
    %v85 = vunpack.c.l.b16 %v44
    %v86 = vunpack.c.l.b16 %v45
    %v87 = vunpack.c.l.b16 %v46
    %v88 = vunpack.c.l.b16 %v47
    %v89 = vunpack.c.l.b16 %v48
    %v90 = vunpack.c.l.b16 %v49
    %v91 = vunpack.c.l.b16 %v50
    %v92 = vunpack.c.l.b16 %v51
    %v93 = vunpack.c.l.b16 %v52
    %v94 = vunpack.c.l.b16 %v53
    %v95 = vunpack.c.l.b16 %v54
    %v96 = vunpack.c.l.b16 %v55
    %v97 = vpack.c.b16 %v86, %v85
    %v98 = vpack.c.b16 %v88, %v87
    %v99 = vpack.c.b16 %v90, %v89
    %v100 = vpack.c.b16 %v92, %v91
    %v101 = vpack.c.b16 %v94, %v93
    %v102 = vpack.c.b16 %v96, %v95
    %vm109 = vcmask 785408
    %v111 = vsel %vm109, %v71, 0
    %v114 = vsel %vm109, %v72, 0
    %116 = vmatprep.subr.bf16.mxu0 0
    %117 = vmatpush1.bf16.msra.mxu0 0
    %118 = vmatprep.subr.bf16.mxu0 0
    %119 = vmatpush1.bf16.msra.mxu0 0
    %120 = vmatprep.subr.bf16.mxu0 0
    %121 = vmatpush1.bf16.msra.mxu0 %v102
    %122 = vmatprep.subr.bf16.mxu0 0
    %123 = vmatpush1.bf16.msra.mxu0 %v101
    %124 = vmatprep.subr.bf16.mxu0 0
    %125 = vmatpush1.bf16.msra.mxu0 %v100
    %126 = vmatprep.subr.bf16.mxu0 0
    %127 = vmatpush1.bf16.msra.mxu0 %v99
    %128 = vmatprep.subr.bf16.mxu0 0
    %129 = vmatpush1.bf16.msra.mxu0 %v98
    %130 = vmatprep.subr.bf16.mxu0 0
    %131 = vmatpush1.bf16.msra.mxu0 %v97
    %132 = vmatprep.subr.bf16.mxu0 0
    %133 = vmatpush2.bf16.msra.mxu0 0
    %134 = vmatprep.subr.bf16.mxu0 0
    %135 = vmatpush2.bf16.msra.mxu0 0
    %136 = vmatprep.subr.bf16.mxu0 0
    %137 = vmatpush2.bf16.msra.mxu0 0
    %138 = vmatprep.subr.bf16.mxu0 0
    %139 = vmatpush2.bf16.msra.mxu0 0
    %140 = vmatprep.subr.bf16.mxu0 0
    %141 = vmatpush2.bf16.msra.mxu0 0
    %142 = vmatprep.subr.bf16.mxu0 0
    %143 = vmatpush2.bf16.msra.mxu0 0
    %144 = vmatprep.subr.bf16.mxu0 0
    %145 = vmatpush2.bf16.msra.mxu0 0
    %146 = vmatprep.subr.bf16.mxu0 0
    %147 = vmatpush2.bf16.msra.mxu0 0
    %148 = vmatprep.mubr.bf16.mxu0 0
    %149 = vmatmul.mubr.bf16.gmra.mxu0 %v111
    %v150 = vpop.f32.mrf.mxu0
    %v151 = vadd.f32 %v61, %v150
    %v152 = vpop.f32.mrf.mxu0
    %v153 = vpop.f32.mrf.mxu0
    %v154 = vadd.f32 %v61, %v153
    %v155 = vpop.f32.mrf.mxu0
    %156 = vmatprep.mubr.bf16.mxu0 0
    %157 = vmatmul.mubr.bf16.gmra.mxu0 %v114
    %v158 = vpop.f32.mrf.mxu0
    %v159 = vadd.f32 %v61, %v158
    %v160 = vpop.f32.mrf.mxu0
    %v161 = vpop.f32.mrf.mxu0
    %v162 = vadd.f32 %v61, %v161
    %v163 = vpop.f32.mrf.mxu0
    %164 = vdwg.mxu0
    %v165 = vld [vmem:[%s2] sm:$0xf]
    %v166 = vld [vmem:[%s2 + $0x4] sm:$0xf]
    %v167 = vld [vmem:[%s2 + $0x8] sm:$0xf]
    %v168 = vld [vmem:[%s2 + $0xc] sm:$0xf]
    %v169 = vld [vmem:[%s2 + $0x10] sm:$0xf]
    %v170 = vld [vmem:[%s2 + $0x14] sm:$0xf]
    %v171 = vld [vmem:[%s2 + $0x18] sm:$0xf]
    %v172 = vld [vmem:[%s2 + $0x1c] sm:$0xf]
    %v173 = vld [vmem:[%s2 + $0x20] sm:$0xf]
    %v174 = vld [vmem:[%s2 + $0x24] sm:$0xf]
    %v175 = vld [vmem:[%s2 + $0x28] sm:$0xf]
    %v176 = vld [vmem:[%s2 + $0x2c] sm:$0xf]
    %v177 = vld [vmem:[%s4] sm:$0x1]
    %v179 = vlaneseq
    %v180 = vshrl.u32 %v179, 7
    %v181 = vsub.s32 0, %v180
    %v182 = vrot.slane %v177, %v181
    %v196 = vunpack.c.l.b16 %v165
    %v197 = vunpack.c.l.b16 %v166
    %v198 = vunpack.c.l.b16 %v167
    %v199 = vunpack.c.l.b16 %v168
    %v200 = vunpack.c.l.b16 %v169
    %v201 = vunpack.c.l.b16 %v170
    %v202 = vunpack.c.l.b16 %v171
    %v203 = vunpack.c.l.b16 %v172
    %v204 = vunpack.c.l.b16 %v173
    %v205 = vunpack.c.l.b16 %v174
    %v206 = vunpack.c.l.b16 %v175
    %v207 = vunpack.c.l.b16 %v176
    %v208 = vpack.c.b16 %v197, %v196
    %v209 = vpack.c.b16 %v199, %v198
    %v210 = vpack.c.b16 %v201, %v200
    %v211 = vpack.c.b16 %v203, %v202
    %v212 = vpack.c.b16 %v205, %v204
    %v213 = vpack.c.b16 %v207, %v206
    %220 = vmatprep.subr.bf16.mxu0 0
    %221 = vmatpush1.bf16.msra.mxu0 0
    %222 = vmatprep.subr.bf16.mxu0 0
    %223 = vmatpush1.bf16.msra.mxu0 0
    %224 = vmatprep.subr.bf16.mxu0 0
    %225 = vmatpush1.bf16.msra.mxu0 %v213
    %226 = vmatprep.subr.bf16.mxu0 0
    %227 = vmatpush1.bf16.msra.mxu0 %v212
    %228 = vmatprep.subr.bf16.mxu0 0
    %229 = vmatpush1.bf16.msra.mxu0 %v211
    %230 = vmatprep.subr.bf16.mxu0 0
    %231 = vmatpush1.bf16.msra.mxu0 %v210
    %232 = vmatprep.subr.bf16.mxu0 0
    %233 = vmatpush1.bf16.msra.mxu0 %v209
    %234 = vmatprep.subr.bf16.mxu0 0
    %235 = vmatpush1.bf16.msra.mxu0 %v208
    %236 = vmatprep.subr.bf16.mxu0 0
    %237 = vmatpush2.bf16.msra.mxu0 0
    %238 = vmatprep.subr.bf16.mxu0 0
    %239 = vmatpush2.bf16.msra.mxu0 0
    %240 = vmatprep.subr.bf16.mxu0 0
    %241 = vmatpush2.bf16.msra.mxu0 0
    %242 = vmatprep.subr.bf16.mxu0 0
    %243 = vmatpush2.bf16.msra.mxu0 0
    %244 = vmatprep.subr.bf16.mxu0 0
    %245 = vmatpush2.bf16.msra.mxu0 0
    %246 = vmatprep.subr.bf16.mxu0 0
    %247 = vmatpush2.bf16.msra.mxu0 0
    %248 = vmatprep.subr.bf16.mxu0 0
    %249 = vmatpush2.bf16.msra.mxu0 0
    %250 = vmatprep.subr.bf16.mxu0 0
    %251 = vmatpush2.bf16.msra.mxu0 0
    %252 = vmatprep.mubr.bf16.mxu0 0
    %253 = vmatmul.mubr.bf16.gmra.mxu0 %v111
    %v254 = vpop.f32.mrf.mxu0
    %v255 = vadd.f32 %v182, %v254
    %v256 = vpop.f32.mrf.mxu0
    %v257 = vpop.f32.mrf.mxu0
    %v258 = vadd.f32 %v182, %v257
    %v259 = vpop.f32.mrf.mxu0
    %260 = vmatprep.mubr.bf16.mxu0 0
    %261 = vmatmul.mubr.bf16.gmra.mxu0 %v114
    %v262 = vpop.f32.mrf.mxu0
    %v263 = vadd.f32 %v182, %v262
    %v264 = vpop.f32.mrf.mxu0
    %v265 = vpop.f32.mrf.mxu0
    %v266 = vadd.f32 %v182, %v265
    %v267 = vpop.f32.mrf.mxu0
    %268 = vdwg.mxu0
    %v269 = vxor.u32 %v255, 2147483648
    %v270 = vxor.u32 %v258, 2147483648
    %v271 = vxor.u32 %v263, 2147483648
    %v272 = vxor.u32 %v266, 2147483648
    %v273 = vmul.f32 %v269, 1.442695
    %v274 = vpow.pop %v273
    %v275 = vmul.f32 %v270, 1.442695
    %v276 = vpow.pop %v275
    %v277 = vmul.f32 %v271, 1.442695
    %v278 = vpow.pop %v277
    %v279 = vmul.f32 %v272, 1.442695
    %v280 = vpow.pop %v279
    %v281 = vadd.f32 %v274, 1.0
    %v282 = vadd.f32 %v276, 1.0
    %v283 = vadd.f32 %v278, 1.0
    %v284 = vadd.f32 %v280, 1.0
    %v285 = vrcp.pop %v281
    %v286 = vmul.f32 1.0, %v285
    %v287 = vrcp.pop %v282
    %v288 = vmul.f32 1.0, %v287
    %v289 = vrcp.pop %v283
    %v290 = vmul.f32 1.0, %v289
    %v291 = vrcp.pop %v284
    %v292 = vmul.f32 1.0, %v291
    %v293 = vmul.f32 %v151, %v286
    %v294 = vmul.f32 %v154, %v288
    %v295 = vmul.f32 %v159, %v290
    %v296 = vmul.f32 %v162, %v292
    %v297 = vpack.c.bf16 %v294, %v293
    %v298 = vpack.c.bf16 %v296, %v295
    %v299 = vld [vmem:[%s6] sm:$0xf]
    %v300 = vld [vmem:[%s6 + $0x4] sm:$0xf]
    %v301 = vld [vmem:[%s6 + $0x8] sm:$0xf]
    %v302 = vld [vmem:[%s6 + $0xc] sm:$0xf]
    %v303 = vld [vmem:[%s6 + $0x10] sm:$0xf]
    %v304 = vld [vmem:[%s6 + $0x14] sm:$0xf]
    %v305 = vld [vmem:[%s6 + $0x18] sm:$0xf]
    %v306 = vld [vmem:[%s6 + $0x1c] sm:$0xf]
    %v315 = vunpack.c.l.b16 %v299
    %v316 = vunpack.c.l.b16 %v300
    %v317 = vunpack.c.l.b16 %v301
    %v318 = vunpack.c.l.b16 %v302
    %v319 = vunpack.c.l.b16 %v303
    %v320 = vunpack.c.l.b16 %v304
    %v321 = vunpack.c.l.b16 %v305
    %v322 = vunpack.c.l.b16 %v306
    %v323 = vpack.c.b16 %v316, %v315
    %v324 = vpack.c.b16 %v318, %v317
    %v325 = vpack.c.b16 %v320, %v319
    %v326 = vpack.c.b16 %v322, %v321
    %vm331 = vcmask 523264
    %v333 = vsel %vm331, %v297, 0
    %v336 = vsel %vm331, %v298, 0
    %338 = vmatprep.subr.bf16.mxu0 0
    %339 = vmatpush1.bf16.msra.mxu0 0
    %340 = vmatprep.subr.bf16.mxu0 0
    %341 = vmatpush1.bf16.msra.mxu0 0
    %342 = vmatprep.subr.bf16.mxu0 0
    %343 = vmatpush1.bf16.msra.mxu0 0
    %344 = vmatprep.subr.bf16.mxu0 0
    %345 = vmatpush1.bf16.msra.mxu0 0
    %346 = vmatprep.subr.bf16.mxu0 0
    %347 = vmatpush1.bf16.msra.mxu0 %v326
    %348 = vmatprep.subr.bf16.mxu0 0
    %349 = vmatpush1.bf16.msra.mxu0 %v325
    %350 = vmatprep.subr.bf16.mxu0 0
    %351 = vmatpush1.bf16.msra.mxu0 %v324
    %352 = vmatprep.subr.bf16.mxu0 0
    %353 = vmatpush1.bf16.msra.mxu0 %v323
    %354 = vmatprep.subr.bf16.mxu0 0
    %355 = vmatpush2.bf16.msra.mxu0 0
    %356 = vmatprep.subr.bf16.mxu0 0
    %357 = vmatpush2.bf16.msra.mxu0 0
    %358 = vmatprep.subr.bf16.mxu0 0
    %359 = vmatpush2.bf16.msra.mxu0 0
    %360 = vmatprep.subr.bf16.mxu0 0
    %361 = vmatpush2.bf16.msra.mxu0 0
    %362 = vmatprep.subr.bf16.mxu0 0
    %363 = vmatpush2.bf16.msra.mxu0 0
    %364 = vmatprep.subr.bf16.mxu0 0
    %365 = vmatpush2.bf16.msra.mxu0 0
    %366 = vmatprep.subr.bf16.mxu0 0
    %367 = vmatpush2.bf16.msra.mxu0 0
    %368 = vmatprep.subr.bf16.mxu0 0
    %369 = vmatpush2.bf16.msra.mxu0 0
    %370 = vmatprep.mubr.bf16.mxu0 0
    %371 = vmatmul.mubr.bf16.gmra.mxu0 %v333
    %v372 = vpop.f32.mrf.mxu0
    %v373 = vadd.f32 0.0, %v372
    %v374 = vpop.f32.mrf.mxu0
    %v375 = vpop.f32.mrf.mxu0
    %v376 = vadd.f32 0.0, %v375
    %v377 = vpop.f32.mrf.mxu0
    %378 = vmatprep.mubr.bf16.mxu0 0
    %379 = vmatmul.mubr.bf16.gmra.mxu0 %v336
    %v380 = vpop.f32.mrf.mxu0
    %v381 = vadd.f32 0.0, %v380
    %v382 = vpop.f32.mrf.mxu0
    %v383 = vpop.f32.mrf.mxu0
    %v384 = vadd.f32 0.0, %v383
    %v385 = vpop.f32.mrf.mxu0
    %386 = vdwg.mxu0
    %v387 = vld [vmem:[%s5] sm:$0xf]
    %v388 = vld [vmem:[%s5 + $0x4] sm:$0xf]
    %v389 = vld [vmem:[%s5 + $0x8] sm:$0xf]
    %v390 = vld [vmem:[%s5 + $0xc] sm:$0xf]
    %v391 = vpack.c.bf16 %v376, %v373
    %v392 = vpack.c.bf16 %v384, %v381
    %v393 = vld [vmem:[%s7] sm:$0x1]
    %v395 = vlaneseq
    %v396 = vshrl.u32 %v395, 7
    %v397 = vsub.s32 0, %v396
    %v398 = vrot.slane %v393, %v397
    %v404 = vunpack.c.l.b16 %v387
    %v405 = vunpack.c.l.b16 %v388
    %v406 = vunpack.c.l.b16 %v389
    %v407 = vunpack.c.l.b16 %v390
    %v408 = vpack.c.b16 %v405, %v404
    %v409 = vpack.c.b16 %v407, %v406
    %vm410 = vcmask 261120
    %v412 = vsel %vm410, %v408, 0
    %v415 = vsel %vm410, %v409, 0
    %417 = vmatprep.subr.bf16.mxu0 0
    %418 = vmatpush1.bf16.msra.mxu0 0
    %419 = vmatprep.subr.bf16.mxu0 0
    %420 = vmatpush1.bf16.msra.mxu0 0
    %421 = vmatprep.subr.bf16.mxu0 0
    %422 = vmatpush1.bf16.msra.mxu0 0
    %423 = vmatprep.subr.bf16.mxu0 0
    %424 = vmatpush1.bf16.msra.mxu0 0
    %425 = vmatprep.subr.bf16.mxu0 0
    %426 = vmatpush1.bf16.msra.mxu0 0
    %427 = vmatprep.subr.bf16.mxu0 0
    %428 = vmatpush1.bf16.msra.mxu0 0
    %429 = vmatprep.subr.bf16.mxu0 0
    %430 = vmatpush1.bf16.msra.mxu0 %v392
    %431 = vmatprep.subr.bf16.mxu0 0
    %432 = vmatpush1.bf16.msra.mxu0 %v391
    %433 = vmatprep.subr.bf16.mxu0 0
    %434 = vmatpush2.bf16.msra.mxu0 0
    %435 = vmatprep.subr.bf16.mxu0 0
    %436 = vmatpush2.bf16.msra.mxu0 0
    %437 = vmatprep.subr.bf16.mxu0 0
    %438 = vmatpush2.bf16.msra.mxu0 0
    %439 = vmatprep.subr.bf16.mxu0 0
    %440 = vmatpush2.bf16.msra.mxu0 0
    %441 = vmatprep.subr.bf16.mxu0 0
    %442 = vmatpush2.bf16.msra.mxu0 0
    %443 = vmatprep.subr.bf16.mxu0 0
    %444 = vmatpush2.bf16.msra.mxu0 0
    %445 = vmatprep.subr.bf16.mxu0 0
    %446 = vmatpush2.bf16.msra.mxu0 0
    %447 = vmatprep.subr.bf16.mxu0 0
    %448 = vmatpush2.bf16.msra.mxu0 0
    %449 = vmatprep.mubr.bf16.mxu0 0
    %450 = vmatmul.mubr.bf16.gmra.mxu0 %v412
    %v451 = vpop.f32.mrf.mxu0
    %v452 = vadd.f32 %v398, %v451
    %v453 = vpop.f32.mrf.mxu0
    %v454 = vpop.f32.mrf.mxu0
    %v455 = vadd.f32 %v398, %v454
    %v456 = vpop.f32.mrf.mxu0
    %457 = vmatprep.mubr.bf16.mxu0 0
    %458 = vmatmul.mubr.bf16.gmra.mxu0 %v415
    %v459 = vpop.f32.mrf.mxu0
    %v460 = vadd.f32 %v398, %v459
    %v461 = vpop.f32.mrf.mxu0
    %v462 = vpop.f32.mrf.mxu0
    %v463 = vadd.f32 %v398, %v462
    %v464 = vpop.f32.mrf.mxu0
    %465 = vdwg.mxu0
    %v466 = vld [vmem:[%s8] sm:$0xff]
    %v467 = vld [vmem:[%s8 + $0x8] sm:$0xff]
    %v468 = vld [vmem:[%s8 + $0x10] sm:$0xff]
    %v469 = vld [vmem:[%s8 + $0x18] sm:$0xff]
    %v470 = vld [vmem:[%s8 + $0x20] sm:$0xff]
    %v471 = vld [vmem:[%s8 + $0x28] sm:$0xff]
    %v472 = vld [vmem:[%s8 + $0x30] sm:$0xff]
    %v473 = vld [vmem:[%s8 + $0x38] sm:$0xff]
    %v475 = vsel %vm331, %v452, 0
    %v478 = vsel %vm331, %v455, 0
    %v481 = vsel %vm331, %v460, 0
    %v484 = vsel %vm331, %v463, 0
    %486 = vmatprep.subr.mxu0 0.0
    %487 = vmatpush1.msra.mxu0 0.0
    %488 = vmatprep.subr.mxu0 0.0
    %489 = vmatpush1.msra.mxu0 0.0
    %490 = vmatprep.subr.mxu0 0.0
    %491 = vmatpush1.msra.mxu0 0.0
    %492 = vmatprep.subr.mxu0 0.0
    %493 = vmatpush1.msra.mxu0 0.0
    %494 = vmatprep.subr.mxu0 0.0
    %495 = vmatpush1.msra.mxu0 0.0
    %496 = vmatprep.subr.mxu0 0.0
    %497 = vmatpush1.msra.mxu0 0.0
    %498 = vmatprep.subr.mxu0 0.0
    %499 = vmatpush1.msra.mxu0 0.0
    %500 = vmatprep.subr.mxu0 0.0
    %501 = vmatpush1.msra.mxu0 0.0
    %502 = vmatprep.subr.mxu0 0.0
    %503 = vmatpush1.msra.mxu0 %v473
    %504 = vmatprep.subr.mxu0 0.0
    %505 = vmatpush1.msra.mxu0 %v472
    %506 = vmatprep.subr.mxu0 0.0
    %507 = vmatpush1.msra.mxu0 %v471
    %508 = vmatprep.subr.mxu0 0.0
    %509 = vmatpush1.msra.mxu0 %v470
    %510 = vmatprep.subr.mxu0 0.0
    %511 = vmatpush1.msra.mxu0 %v469
    %512 = vmatprep.subr.mxu0 0.0
    %513 = vmatpush1.msra.mxu0 %v468
    %514 = vmatprep.subr.mxu0 0.0
    %515 = vmatpush1.msra.mxu0 %v467
    %516 = vmatprep.subr.mxu0 0.0
    %517 = vmatpush1.msra.mxu0 %v466
    %518 = vmatprep.subr.mxu0 0.0
    %519 = vmatpush2.msra.mxu0 0.0
    %520 = vmatprep.subr.mxu0 0.0
    %521 = vmatpush2.msra.mxu0 0.0
    %522 = vmatprep.subr.mxu0 0.0
    %523 = vmatpush2.msra.mxu0 0.0
    %524 = vmatprep.subr.mxu0 0.0
    %525 = vmatpush2.msra.mxu0 0.0
    %526 = vmatprep.subr.mxu0 0.0
    %527 = vmatpush2.msra.mxu0 0.0
    %528 = vmatprep.subr.mxu0 0.0
    %529 = vmatpush2.msra.mxu0 0.0
    %530 = vmatprep.subr.mxu0 0.0
    %531 = vmatpush2.msra.mxu0 0.0
    %532 = vmatprep.subr.mxu0 0.0
    %533 = vmatpush2.msra.mxu0 0.0
    %534 = vmatprep.subr.mxu0 0.0
    %535 = vmatpush2.msra.mxu0 0.0
    %536 = vmatprep.subr.mxu0 0.0
    %537 = vmatpush2.msra.mxu0 0.0
    %538 = vmatprep.subr.mxu0 0.0
    %539 = vmatpush2.msra.mxu0 0.0
    %540 = vmatprep.subr.mxu0 0.0
    %541 = vmatpush2.msra.mxu0 0.0
    %542 = vmatprep.subr.mxu0 0.0
    %543 = vmatpush2.msra.mxu0 0.0
    %544 = vmatprep.subr.mxu0 0.0
    %545 = vmatpush2.msra.mxu0 0.0
    %546 = vmatprep.subr.mxu0 0.0
    %547 = vmatpush2.msra.mxu0 0.0
    %548 = vmatprep.subr.mxu0 0.0
    %549 = vmatpush2.msra.mxu0 0.0
    %550 = vmatprep.mubr.f32.mxu0 0.0
    %551 = vmatmul.mubr.f32.gmra.mxu0 %v475
    %v552 = vpop.f32.mrf.mxu0
    %v553 = vadd.f32 0.0, %v552
    %v554 = vpop.f32.mrf.mxu0
    %555 = vmatprep.mubr.f32.mxu0 0.0
    %556 = vmatmul.mubr.f32.gmra.mxu0 %v478
    %v557 = vpop.f32.mrf.mxu0
    %v558 = vadd.f32 0.0, %v557
    %v559 = vpop.f32.mrf.mxu0
    %560 = vmatprep.mubr.f32.mxu0 0.0
    %561 = vmatmul.mubr.f32.gmra.mxu0 %v481
    %v562 = vpop.f32.mrf.mxu0
    %v563 = vadd.f32 0.0, %v562
    %v564 = vpop.f32.mrf.mxu0
    %565 = vmatprep.mubr.f32.mxu0 0.0
    %566 = vmatmul.mubr.f32.gmra.mxu0 %v484
    %v567 = vpop.f32.mrf.mxu0
    %v568 = vadd.f32 0.0, %v567
    %v569 = vpop.f32.mrf.mxu0
    %570 = vdwg.mxu0
    %v571 = vmul.f32 %v452, %v452
    %v572 = vmul.f32 %v455, %v455
    %v573 = vmul.f32 %v460, %v460
    %v574 = vmul.f32 %v463, %v463
    %v576 = vsel %vm331, %v571, 0
    %v579 = vsel %vm331, %v572, 0
    %v582 = vsel %vm331, %v573, 0
    %v585 = vsel %vm331, %v574, 0
    %587 = vmatprep.subr.mxu0 0.0
    %588 = vmatpush1.msra.mxu0 0.0
    %589 = vmatprep.subr.mxu0 0.0
    %590 = vmatpush1.msra.mxu0 0.0
    %591 = vmatprep.subr.mxu0 0.0
    %592 = vmatpush1.msra.mxu0 0.0
    %593 = vmatprep.subr.mxu0 0.0
    %594 = vmatpush1.msra.mxu0 0.0
    %595 = vmatprep.subr.mxu0 0.0
    %596 = vmatpush1.msra.mxu0 0.0
    %597 = vmatprep.subr.mxu0 0.0
    %598 = vmatpush1.msra.mxu0 0.0
    %599 = vmatprep.subr.mxu0 0.0
    %600 = vmatpush1.msra.mxu0 0.0
    %601 = vmatprep.subr.mxu0 0.0
    %602 = vmatpush1.msra.mxu0 0.0
    %603 = vmatprep.subr.mxu0 0.0
    %604 = vmatpush1.msra.mxu0 %v473
    %605 = vmatprep.subr.mxu0 0.0
    %606 = vmatpush1.msra.mxu0 %v472
    %607 = vmatprep.subr.mxu0 0.0
    %608 = vmatpush1.msra.mxu0 %v471
    %609 = vmatprep.subr.mxu0 0.0
    %610 = vmatpush1.msra.mxu0 %v470
    %611 = vmatprep.subr.mxu0 0.0
    %612 = vmatpush1.msra.mxu0 %v469
    %613 = vmatprep.subr.mxu0 0.0
    %614 = vmatpush1.msra.mxu0 %v468
    %615 = vmatprep.subr.mxu0 0.0
    %616 = vmatpush1.msra.mxu0 %v467
    %617 = vmatprep.subr.mxu0 0.0
    %618 = vmatpush1.msra.mxu0 %v466
    %619 = vmatprep.subr.mxu0 0.0
    %620 = vmatpush2.msra.mxu0 0.0
    %621 = vmatprep.subr.mxu0 0.0
    %622 = vmatpush2.msra.mxu0 0.0
    %623 = vmatprep.subr.mxu0 0.0
    %624 = vmatpush2.msra.mxu0 0.0
    %625 = vmatprep.subr.mxu0 0.0
    %626 = vmatpush2.msra.mxu0 0.0
    %627 = vmatprep.subr.mxu0 0.0
    %628 = vmatpush2.msra.mxu0 0.0
    %629 = vmatprep.subr.mxu0 0.0
    %630 = vmatpush2.msra.mxu0 0.0
    %631 = vmatprep.subr.mxu0 0.0
    %632 = vmatpush2.msra.mxu0 0.0
    %633 = vmatprep.subr.mxu0 0.0
    %634 = vmatpush2.msra.mxu0 0.0
    %635 = vmatprep.subr.mxu0 0.0
    %636 = vmatpush2.msra.mxu0 0.0
    %637 = vmatprep.subr.mxu0 0.0
    %638 = vmatpush2.msra.mxu0 0.0
    %639 = vmatprep.subr.mxu0 0.0
    %640 = vmatpush2.msra.mxu0 0.0
    %641 = vmatprep.subr.mxu0 0.0
    %642 = vmatpush2.msra.mxu0 0.0
    %643 = vmatprep.subr.mxu0 0.0
    %644 = vmatpush2.msra.mxu0 0.0
    %645 = vmatprep.subr.mxu0 0.0
    %646 = vmatpush2.msra.mxu0 0.0
    %647 = vmatprep.subr.mxu0 0.0
    %648 = vmatpush2.msra.mxu0 0.0
    %649 = vmatprep.subr.mxu0 0.0
    %650 = vmatpush2.msra.mxu0 0.0
    %651 = vmatprep.mubr.f32.mxu0 0.0
    %652 = vmatmul.mubr.f32.gmra.mxu0 %v576
    %v653 = vpop.f32.mrf.mxu0
    %v654 = vadd.f32 0.0, %v653
    %v655 = vpop.f32.mrf.mxu0
    %656 = vmatprep.mubr.f32.mxu0 0.0
    %657 = vmatmul.mubr.f32.gmra.mxu0 %v579
    %v658 = vpop.f32.mrf.mxu0
    %v659 = vadd.f32 0.0, %v658
    %v660 = vpop.f32.mrf.mxu0
    %661 = vmatprep.mubr.f32.mxu0 0.0
    %662 = vmatmul.mubr.f32.gmra.mxu0 %v582
    %v663 = vpop.f32.mrf.mxu0
    %v664 = vadd.f32 0.0, %v663
    %v665 = vpop.f32.mrf.mxu0
    %666 = vmatprep.mubr.f32.mxu0 0.0
    %667 = vmatmul.mubr.f32.gmra.mxu0 %v585
    %v668 = vpop.f32.mrf.mxu0
    %v669 = vadd.f32 0.0, %v668
    %v670 = vpop.f32.mrf.mxu0
    %671 = vdwg.mxu0
    %v672 = vsel %vm331, %v553, 0.0
    %v673 = vsel %vm331, %v558, 0.0
    %v674 = vadd.f32 %v672, %v673
    %v675 = vsel %vm331, %v563, 0.0
    %v676 = vadd.f32 %v674, %v675
    %v677 = vsel %vm331, %v568, 0.0
    %v678 = vadd.f32 %v676, %v677
    %v679 = vrot.slane %v678, 4
    %v680 = vadd.f32 %v678, %v679
    %v681 = vrot.slane %v680, 2
    %v682 = vadd.f32 %v680, %v681
    %v683 = vrot.slane %v682, 1
    %v684 = vadd.f32 %v682, %v683
    %v685 = vrcp.pop 32.0
    %v686 = vmul.f32 %v684, %v685
    %v687 = vsel %vm331, %v654, 0.0
    %v688 = vsel %vm331, %v659, 0.0
    %v689 = vadd.f32 %v687, %v688
    %v690 = vsel %vm331, %v664, 0.0
    %v691 = vadd.f32 %v689, %v690
    %v692 = vsel %vm331, %v669, 0.0
    %v693 = vadd.f32 %v691, %v692
    %v694 = vrot.slane %v693, 4
    %v695 = vadd.f32 %v693, %v694
    %v696 = vrot.slane %v695, 2
    %v697 = vadd.f32 %v695, %v696
    %v698 = vrot.slane %v697, 1
    %v699 = vadd.f32 %v697, %v698
    %v700 = vmul.f32 %v699, %v685
    %v701 = vmul.f32 %v686, %v686
    %v702 = vsub.f32 %v700, %v701
    %v703 = vld [vmem:[%s9] sm:$0x1]
    %v704 = vadd.f32 %v702, 1e-05
    %v705 = vrsqrt.pop %v704
    %v706 = vmul.f32 %v703, %v705
    %v707 = vld [vmem:[%s10] sm:$0x1]
    %v708 = vmul.f32 %v686, %v706
    %v709 = vsub.f32 %v707, %v708
    %v711 = vlaneseq
    %v712 = vshrl.u32 %v711, 7
    %v713 = vsub.s32 0, %v712
    %v714 = vrot.slane %v706, %v713
    %v716 = vmul.f32 %v452, %v714
    %v717 = vmul.f32 %v455, %v714
    %v718 = vmul.f32 %v460, %v714
    %v719 = vmul.f32 %v463, %v714
    %v721 = vlaneseq
    %v722 = vshrl.u32 %v721, 7
    %v723 = vsub.s32 0, %v722
    %v724 = vrot.slane %v709, %v723
    %v726 = vadd.f32 %v716, %v724
    %v727 = vadd.f32 %v717, %v724
    %v728 = vadd.f32 %v718, %v724
    %v729 = vadd.f32 %v719, %v724
    %v730 = vmax.f32 %v726, 0.0
    %v731 = vmax.f32 %v727, 0.0
    %v732 = vmax.f32 %v728, 0.0
    %v733 = vmax.f32 %v729, 0.0
    %734 = vst.msk [vmem:[#allocation2] sm:$0xff] %vm331, %v730
    %735 = vst.msk [vmem:[#allocation2 + $0x8] sm:$0xff] %vm331, %v731
    %736 = vst.msk [vmem:[#allocation2 + $0x10] sm:$0xff] %vm331, %v732
    %737 = vst.msk [vmem:[#allocation2 + $0x18] sm:$0xff] %vm331, %v733
    // Predicated region
    $region46: #{tpu_custom_call.1} parent=1 // pred_check
      _
    $region47: #{tpu_custom_call.1} parent=1 // pred_check_branch
      %739 = sbr.rel (0) target = $region49
    $region48: #{tpu_custom_call.1} parent=1 // pred_region
      %s741 = ssub.s32 512, 512
      %742 = vsyncadd [#allocation3], %s741
      %s743 = sshll.u32 [#allocation2], 4
      %s744 = int_to_ptr.vmem [resolvable:$true] %s743
      %749 = dma.vmem_to_hbm [thread:$0]  %s744, 512, %s11, [#allocation3], 128, 128, 8
    $region49: #{tpu_custom_call.1} parent=1 // pred_fallthru
      _
    // Predicated region
    $region50: #{tpu_custom_call.1} parent=1 // pred_check
      _
    $region51: #{tpu_custom_call.1} parent=1 // pred_check_branch
      %751 = sbr.rel (0) target = $region53
    $region52: #{tpu_custom_call.1} parent=1 // pred_region
      %752 = dma.done [#allocation3], 512
    $region53: #{tpu_custom_call.1} parent=1 // pred_fallthru
      _
    %753 = vsyncpa [#allocation3], 1

</llo_original>
